<compile_context>
chip_gen: v5e
topology: v5e:2x2
jax: 0.10.0
libtpu: 0.0.40
codegen_flags: <defaults>
</compile_context>

<pallas_src>
import functools

import jax
import jax.numpy as jnp
from jax.experimental import pallas as pl
from jax.experimental.pallas import tpu as pltpu


def _round_up(x, m):
    return ((x + m - 1) // m) * m


def _softmax_rows_kernel(x_ref, o_ref):
    """Numerically stable softmax over the last axis of one (tile_rows, n_clusters) block."""
    x = x_ref[...].astype(jnp.float32)
    m = jnp.max(x, axis=-1, keepdims=True)
    e = jnp.exp(x - m)
    s = jnp.sum(e, axis=-1, keepdims=True)
    # Exact divide: kernel is HBM-bandwidth-bound, so the VPU divide is fully
    # hidden under DMA and keeps row sums == 1 to float precision.
    o_ref[...] = (e / s).astype(o_ref.dtype)


def _vmem_capacity_bytes():
    try:
        return int(pltpu.get_tpu_info().vmem_capacity_bytes)
    except Exception:
        return 64 * 1024 * 1024  # conservative fallback (v7x per-TC VMEM)


def _pick_tile_rows(n_stops, n_clusters, in_itemsize, out_itemsize, vmem_cap):
    """Row-tile size: multiple of 8, VMEM-aware, ~8 MiB per step, >= 2 grid steps."""
    if n_stops <= 8:
        # Full-dim block (block rows == array rows is always allowed).
        return n_stops

    # Per-row VMEM footprint: double-buffered input + output blocks plus the
    # two block-sized f32 intermediates ((x - m) and e) used in the kernel.
    bytes_per_row = (2 * in_itemsize + 2 * out_itemsize + 2 * 4) * n_clusters
    vmem_budget = vmem_cap // 2  # headroom for Mosaic scratch / regalloc
    rows_by_vmem = max(8, vmem_budget // max(bytes_per_row, 1))

    # Cap per-step input bytes near 8 MiB: the ~0.35 us per-grid-step overhead
    # stays <~5% of the step's DMA time even at v7x's 3.2 TB/s, while staying
    # modest enough for v5e's lower bandwidth / VMEM pressure.
    rows_by_block = max(8, (8 << 20) // max(n_clusters * in_itemsize, 1))

    # Guarantee >= 2 grid steps so dimension_semantics=("parallel",) can shard
    # the grid across v7x's two TensorCores (harmless on v5e/v6e).
    rows_by_cores = _round_up(max(pl.cdiv(n_stops, 2), 8), 8)

    tile = min(rows_by_vmem, rows_by_block, rows_by_cores)
    return max(8, (tile // 8) * 8)


def stop_clustering_forward(cluster_assignments, stop_coordinates=None, *, force_pallas=False):
    """Pallas implementation of StopClusteringModel.forward.

    cluster_assignments: (n_stops, n_clusters) parameter matrix.
    stop_coordinates:    ignored (matches the reference module's forward).
    """
    del stop_coordinates  # unused, per the reference forward()
    n_stops, n_clusters = cluster_assignments.shape
    dtype = cluster_assignments.dtype
    in_itemsize = jnp.dtype(dtype).itemsize
    out_itemsize = in_itemsize  # keep the parameter dtype on output (module semantics)

    # Small-problem fast path: for tiny shapes the pallas_call launch dominates
    # and XLA's fused softmax is strictly faster. The demo forces the kernel.
    if not force_pallas and n_stops * n_clusters * in_itemsize < (1 << 20):
        return jax.nn.softmax(cluster_assignments, axis=1)

    vmem_cap = _vmem_capacity_bytes()
    tile_rows = _pick_tile_rows(n_stops, n_clusters, in_itemsize, out_itemsize, vmem_cap)
    grid = (pl.cdiv(n_stops, tile_rows),)

    # VMEM limit from the real footprint: double-buffered in/out blocks plus
    # the f32 temporaries, with slack; clamped to 90% of physical VMEM.
    block_in = tile_rows * n_clusters * in_itemsize
    block_out = tile_rows * n_clusters * out_itemsize
    needed = 2 * (block_in + block_out) + 2 * tile_rows * n_clusters * 4 + (4 << 20)
    vmem_limit = int(min(max(needed, 32 << 20), int(vmem_cap * 0.9)))

    cost = pl.CostEstimate(
        flops=5 * n_stops * n_clusters,
        transcendentals=n_stops * n_clusters,
        bytes_accessed=n_stops * n_clusters * (in_itemsize + out_itemsize),
    )

    return pl.pallas_call(
        _softmax_rows_kernel,
        out_shape=jax.ShapeDtypeStruct((n_stops, n_clusters), dtype),
        grid_spec=pltpu.PrefetchScalarGridSpec(
            num_scalar_prefetch=0,
            grid=grid,
            # Last block dim == full n_clusters (allowed even when not a
            # multiple of 128): no HBM lane padding, no masking needed.
            in_specs=[pl.BlockSpec((tile_rows, n_clusters), lambda i: (i, 0))],
            out_specs=pl.BlockSpec((tile_rows, n_clusters), lambda i: (i, 0)),
        ),
        compiler_params=pltpu.CompilerParams(
            dimension_semantics=("parallel",),
            vmem_limit_bytes=vmem_limit,
        ),
        cost_estimate=cost,
    )(cluster_assignments)


if __name__ == "__main__":
    # Small shapes consistent with the module: n_stops stops, n_clusters clusters.
    n_stops, n_clusters = 16, 8
    key = jax.random.PRNGKey(0)
    k_param, k_coords = jax.random.split(key)

    # Deterministic "randn" init of the nn.Parameter (torch.randn(n_stops, n_clusters)).
    cluster_assignments = jax.random.normal(k_param, (n_stops, n_clusters), dtype=jnp.float32)
    # stop_coordinates: (n_stops, 2) lat/lon-like input — ignored by forward.
    stop_coordinates = jax.random.normal(k_coords, (n_stops, 2), dtype=jnp.float32)

    fwd = jax.jit(functools.partial(stop_clustering_forward, force_pallas=True))
    out = jax.block_until_ready(fwd(cluster_assignments, stop_coordinates))

    # Sanity check against pure-JAX reference; exact divide -> tight tolerances.
    ref = jax.nn.softmax(cluster_assignments, axis=1)
    assert out.shape == (n_stops, n_clusters)
    assert jnp.allclose(out, ref, atol=1e-5, rtol=1e-5)
    assert jnp.allclose(jnp.sum(out, axis=1), 1.0, atol=1e-5)

    print("KERNEL_OK")
</pallas_src>

<mosaic_0001>
module attributes {stable_mosaic.version = 11 : i64} {
  func.func @_softmax_rows_kernel(%arg0: i32, %arg1: memref<8x8xf32, #tpu.memory_space<vmem>>, %arg2: memref<8x8xf32, #tpu.memory_space<vmem>>) attributes {dimension_semantics = [#tpu.dimension_semantics<parallel>], iteration_bounds = array<i64: 2>, scalar_prefetch = 0 : i64, scratch_operands = 0 : i64, tpu.core_type = #tpu.core_type<tc>, window_params = [{transform_indices = @transform_0, window_bounds = array<i64: 8, 8>}, {transform_indices = @transform_1, window_bounds = array<i64: 8, 8>}]} {
    %c0 = arith.constant 0 : index
    %c0_0 = arith.constant 0 : index
    %0 = vector.load %arg1[%c0, %c0_0] : memref<8x8xf32, #tpu.memory_space<vmem>>, vector<8x8xf32>
    %cst = arith.constant dense<0xFF800000> : vector<8xf32>
    %1 = vector.multi_reduction <maximumf>, %0, %cst [1] : vector<8x8xf32> to vector<8xf32>
    %2 = vector.shape_cast %1 : vector<8xf32> to vector<8x1xf32>
    %3 = vector.broadcast %2 : vector<8x1xf32> to vector<8x8xf32>
    %4 = arith.subf %0, %3 : vector<8x8xf32>
    %5 = math.exp %4 : vector<8x8xf32>
    %cst_1 = arith.constant dense<0.000000e+00> : vector<8xf32>
    %6 = vector.multi_reduction <add>, %5, %cst_1 [1] : vector<8x8xf32> to vector<8xf32>
    %7 = vector.shape_cast %6 : vector<8xf32> to vector<8x1xf32>
    %8 = vector.broadcast %7 : vector<8x1xf32> to vector<8x8xf32>
    %9 = arith.divf %5, %8 : vector<8x8xf32>
    %c0_2 = arith.constant 0 : index
    %c0_3 = arith.constant 0 : index
    %10 = vector.load %arg2[%c0_2, %c0_3] : memref<8x8xf32, #tpu.memory_space<vmem>>, vector<8x8xf32>
    tpu.vector_store %arg2[%c0_2, %c0_3], %9 {strides = array<i32>} : memref<8x8xf32, #tpu.memory_space<vmem>>, vector<8x8xf32>,
    return
  }
  func.func @transform_0(%arg0: i32) -> (i32, i32) {
    %c0_i32 = arith.constant 0 : i32
    %c0_i32_0 = arith.constant 0 : i32
    return %arg0, %c0_i32 : i32, i32
  }
  func.func @transform_1(%arg0: i32) -> (i32, i32) {
    %c0_i32 = arith.constant 0 : i32
    %c0_i32_0 = arith.constant 0 : i32
    return %arg0, %c0_i32 : i32, i32
  }
}

</mosaic_0001>

<llo_original>
// kernel: stop_clustering_forward.1
$region0: #{stop_clustering_forward.1}
  #allocation0 [shape = 'u32[]', space=smem, size = 0x4, offset = 0x4, fixed_abs, tag = 'smem constant byte address 0x4 - core index']
  #allocation1 [shape = 'u32[72,128]{1,0:T(1,128)}', space=vmem, size = 0x9000, scoped, tag = 'internal scratch']
  %s0 = inlined_call_operand.vmem [shape: f32[16,8], index: 0, kind: input, shape index: {}]
  %s1 = inlined_call_operand.vmem [shape: f32[16,8], index: 1, kind: output, shape index: {}]
  %s2 = sld [smem:[#allocation0]]
  $region37: #{stop_clustering_forward.1} parent=0
    _
  %s4 = ssub.s32 1, %s2
  %s5 = scalar_select 0, %s4, %s2
  loop: start=0, step=1, limit=4
  $region2: #{stop_clustering_forward.1} parent=0 // loop_pre_header
    _
  $region3: #{stop_clustering_forward.1} parent=0 // loop_header
    %s7 = sphi 0, %s11
    %p8 = scmp.ge.s32.totalorder %s7, 4
    %s17 = sphi 0, %s19
    %s20 = sphi 0, %s17
    %s21 = sphi 0, %s20
    %s37 = sphi 0, %s21
    %s43 = sphi 0, %s45
    %s46 = sphi 0, %s43
    %s47 = sphi 0, %s46
    %s63 = sphi 0, %s47
  $region4: #{stop_clustering_forward.1} parent=0 // loop_header_branch
    %10 = sbr.rel (%p8) target = $region8
  $region5: #{stop_clustering_forward.1} parent=0 // loop_body
    %s12 = ssub.s32 %s7, 1
    %s13 = ssub.s32 %s7, 2
    %s14 = sadd.s32 %s7, 1
    %s15 = ssub.s32 %s7, %s14
    %p16 = scmp.eq.s32.totalorder %s15, 0
    %s18 = sadd.s32 %s17, 1
    %s19 = scalar_select %p16, %s17, %s18
    %p22 = pneg %p16
    %p23 = scmp.eq.s32.totalorder %s7, 1
    %p24 = por %p22, %p23
    %p25 = scmp.ne.s32.totalorder %s17, %s20
    %p26 = scmp.eq.s32.totalorder %s7, 0
    %p27 = por %p25, %p26
    %p28 = scmp.ne.s32.totalorder %s17, %s20
    %p29 = scmp.eq.s32.totalorder %s12, 1
    %p30 = por %p28, %p29
    %p31 = scmp.ne.s32.totalorder %s20, %s21
    %p32 = scmp.eq.s32.totalorder %s12, 0
    %p33 = por %p31, %p32
    %p34 = scmp.ne.s32.totalorder %s20, %s21
    %p35 = scmp.eq.s32.totalorder %s13, 1
    %p36 = por %p34, %p35
    %p38 = scmp.ne.s32.totalorder %s21, %s37
    %p39 = scmp.eq.s32.totalorder %s13, 0
    %p40 = por %p38, %p39
    %s41 = ssub.s32 %s7, %s14
    %p42 = scmp.eq.s32.totalorder %s41, 0
    %s44 = sadd.s32 %s43, 1
    %s45 = scalar_select %p42, %s43, %s44
    %p48 = pneg %p42
    %p49 = scmp.eq.s32.totalorder %s7, 1
    %p50 = por %p48, %p49
    %p51 = scmp.ne.s32.totalorder %s43, %s46
    %p52 = scmp.eq.s32.totalorder %s7, 0
    %p53 = por %p51, %p52
    %p54 = scmp.ne.s32.totalorder %s43, %s46
    %p55 = scmp.eq.s32.totalorder %s12, 1
    %p56 = por %p54, %p55
    %p57 = scmp.ne.s32.totalorder %s46, %s47
    %p58 = scmp.eq.s32.totalorder %s12, 0
    %p59 = por %p57, %p58
    %p60 = scmp.ne.s32.totalorder %s46, %s47
    %p61 = scmp.eq.s32.totalorder %s13, 1
    %p62 = por %p60, %p61
    %p64 = scmp.ne.s32.totalorder %s47, %s63
    %p65 = scmp.eq.s32.totalorder %s13, 0
    %p66 = por %p64, %p65
    %p67 = scmp.le.s32.totalorder 1, %s7
    %p68 = scmp.lt.s32.totalorder %s7, 3
    %p69 = pnand %p67, %p68
    %p70 = pneg %p69
    // Predicated region
    $region9: #{stop_clustering_forward.1} parent=5 // pred_check
      _
    $region10: #{stop_clustering_forward.1} parent=5 // pred_check_branch
      %72 = sbr.rel (%p69) target = $region12
    $region11: #{stop_clustering_forward.1} parent=5 // pred_region
      %s73 = ssub.s32 %s7, 1
    $region12: #{stop_clustering_forward.1} parent=5 // pred_fallthru
      _
    %p74 = scmp.lt.s32.totalorder %s7, 2
    // Predicated region
    $region13: #{stop_clustering_forward.1} parent=5 // pred_check
      %p75 = pneg %p74
    $region14: #{stop_clustering_forward.1} parent=5 // pred_check_branch
      %77 = sbr.rel (%p75) target = $region16
    $region15: #{stop_clustering_forward.1} parent=5 // pred_region
      // Predicated region
      $region17: #{stop_clustering_forward.1} parent=15 // pred_check
        %p78 = pneg %p27
      $region18: #{stop_clustering_forward.1} parent=15 // pred_check_branch
        %80 = sbr.rel (%p78) target = $region20
      $region19: #{stop_clustering_forward.1} parent=15 // pred_region
        %p81 = scmp.lt.s32.totalorder %s7, 1
        %s82 = scalar_select %p81, %s7, 1
        %s83 = smul.addr %s82, 8
        %s84 = scalar_lea.vmem %s0, %s83
      $region20: #{stop_clustering_forward.1} parent=15 // pred_fallthru
        _
    $region16: #{stop_clustering_forward.1} parent=5 // pred_fallthru
      _
    %p85 = scmp.le.s32.totalorder 1, %s7
    %p86 = scmp.lt.s32.totalorder %s7, 3
    %p87 = pnand %p85, %p86
    %p88 = pneg %p87
    // Predicated region
    $region21: #{stop_clustering_forward.1} parent=5 // pred_check
      _
    $region22: #{stop_clustering_forward.1} parent=5 // pred_check_branch
      %90 = sbr.rel (%p87) target = $region24
    $region23: #{stop_clustering_forward.1} parent=5 // pred_region
      %s91 = ssub.s32 %s7, 1
      %p92 = scmp.lt.s32.totalorder %s12, 1
      %s93 = scalar_select %p92, %s12, 1
      %s94 = smul.addr %s93, 8
      %s95 = scalar_lea.vmem %s0, %s94
      %p96 = pneg %p33
      %p97 = pneg %p30
      %p98 = pneg %p59
      %p99 = pneg %p56
      %p100 = scmp.lt.s32.totalorder %s12, 1
      %s101 = scalar_select %p100, %s12, 1
      %s102 = smul.addr %s101, 8
      %s103 = scalar_lea.vmem %s1, %s102
      %p104 = scmp.lt.s32.totalorder %s12, 1
      %s105 = scalar_select %p104, %s12, 1
      %s106 = smul.addr %s105, 8
      %s107 = scalar_lea.vmem %s0, %s106
      %p108 = scmp.lt.s32.totalorder %s12, 1
      %s109 = scalar_select %p108, %s12, 1
      %s110 = smul.addr %s109, 8
      %s111 = scalar_lea.vmem %s1, %s110
      %v112 = vld [vmem:[%s107] sm:$0xff]
      %vm113 = vcmask 64512
      %v114 = vsel %vm113, %v112, -inf
      %115 = vmax.xlane.f32.xlu0 %v114
      %v116 = vpop.xlane.xlu0 %115
      %v117 = vsub.f32 %v112, %v116
      %v118 = vmul.f32 %v117, 1.442695
      %v119 = vpow.pop %v118
      %v120 = vsel %vm113, %v119, 0.0
      %121 = vadd.xlane.f32.xlu0 %v120
      %v122 = vpop.xlane.xlu0 %121
      %v123 = vrcp.pop %v122
      %v124 = vmul.f32 %v122, %v123
      %v125 = vsub.f32 1.0, %v124
      %v126 = vmul.f32 %v123, %v125
      %v127 = vadd.f32 %v123, %v126
      %vm128 = vweird.f32 %v122
      %vm129 = vweird.f32 %v123
      %vm130 = vmor %vm128, %vm129
      %v131 = vsel %vm130, %v123, %v127
      %v132 = vand.u32 2147483647, %v122
      %vm133 = vcmp.eq.f32.partialorder %v132, 8.507059e+37
      %v134 = vand.u32 %v122, 2147483648
      %v135 = vor.u32 1.1754944e-38, %v134
      %v136 = vsel %vm133, %v135, %v131
      %v137 = vmul.f32 %v119, %v136
      %138 = vst.msk [vmem:[%s111] sm:$0xff] %vm113, %v137
      %p139 = scmp.lt.s32.totalorder %s12, 1
      %s140 = scalar_select %p139, %s12, 1
      %s141 = smul.addr %s140, 8
      %s142 = scalar_lea.vmem %s1, %s141
      // Predicated region
      $region25: #{stop_clustering_forward.1} parent=23 // pred_check
        %p143 = pneg %p56
      $region26: #{stop_clustering_forward.1} parent=23 // pred_check_branch
        %145 = sbr.rel (%p143) target = $region28
      $region27: #{stop_clustering_forward.1} parent=23 // pred_region
        _
      $region28: #{stop_clustering_forward.1} parent=23 // pred_fallthru
        _
    $region24: #{stop_clustering_forward.1} parent=5 // pred_fallthru
      _
    %p146 = scmp.le.s32.totalorder 2, %s7
    // Predicated region
    $region29: #{stop_clustering_forward.1} parent=5 // pred_check
      %p147 = pneg %p146
    $region30: #{stop_clustering_forward.1} parent=5 // pred_check_branch
      %149 = sbr.rel (%p147) target = $region32
    $region31: #{stop_clustering_forward.1} parent=5 // pred_region
      %s150 = ssub.s32 %s7, 2
      // Predicated region
      $region33: #{stop_clustering_forward.1} parent=31 // pred_check
        %p151 = pneg %p62
      $region34: #{stop_clustering_forward.1} parent=31 // pred_check_branch
        %153 = sbr.rel (%p151) target = $region36
      $region35: #{stop_clustering_forward.1} parent=31 // pred_region
        %p154 = scmp.lt.s32.totalorder %s13, 1
        %s155 = scalar_select %p154, %s13, 1
        %s156 = smul.addr %s155, 8
        %s157 = scalar_lea.vmem %s1, %s156
      $region36: #{stop_clustering_forward.1} parent=31 // pred_fallthru
        _
    $region32: #{stop_clustering_forward.1} parent=5 // pred_fallthru
      _
  $region6: #{stop_clustering_forward.1} parent=0 // loop_footer
    %s11 = sadd.s32 1, %s7
  $region7: #{stop_clustering_forward.1} parent=0 // loop_footer_branch
    %6 = sbr.rel target = $region3
  $region8: #{stop_clustering_forward.1} parent=0 // loop_exit
    _

</llo_original>
